<compile_context>
chip_gen: v6e
topology: v6e:2x2x1
jax: 0.10.0
libtpu: 0.0.40
codegen_flags: <defaults>
</compile_context>

<pallas_src>
from functools import partial

import jax
import jax.numpy as jnp
from jax.experimental import pallas as pl
from jax.experimental.pallas import tpu as pltpu


# ---------------------------------------------------------------------------
# Kernel bodies
# ---------------------------------------------------------------------------

def _sigmoid(x, approx):
    if approx:
        # exp goes to the EUP; the approx reciprocal uses the EUP vrcp slot
        # instead of a VALU divide (both slots are otherwise idle here).
        return pl.reciprocal(jnp.exp(-x) + 1.0, approx=True)
    return jax.nn.sigmoid(x)


def _linear_se_kernel_fused(state_ref, inp_ref, w1_ref, b1_ref, w2_ref, b2_ref,
                            out_ref, *, approx_sigmoid):
    """Second layer as one [hidden, 2*dims] matmul; requires dims % 128 == 0 so
    the gate/bias slice of the f32 result lands on a lane-tile boundary."""
    dims = out_ref.shape[-1]
    # FC1 + ReLU (f32 accumulation on the MXU).
    h = jnp.dot(state_ref[...], w1_ref[...], preferred_element_type=jnp.float32)
    h = jnp.maximum(h + b1_ref[...].astype(jnp.float32), 0.0)
    h = h.astype(w2_ref.dtype)          # bf16 weights -> native MXU rate
    # FC2: single N = 2*dims matmul fills the 256-wide MXU on v6e/v7x.
    p = jnp.dot(h, w2_ref[...], preferred_element_type=jnp.float32)
    p = p + b2_ref[...].astype(jnp.float32)
    gate = p[:, :dims]                  # lane-aligned slices (dims % 128 == 0)
    bias = p[:, dims:]
    z = _sigmoid(gate, approx_sigmoid)
    out_ref[...] = (inp_ref[...].astype(jnp.float32) * z + bias).astype(out_ref.dtype)


def _linear_se_kernel_split(state_ref, inp_ref, w1_ref, b1_ref,
                            w2g_ref, w2b_ref, b2g_ref, b2b_ref, out_ref,
                            *, approx_sigmoid):
    """Fallback for dims not a multiple of 128: the second layer is pre-split
    host-side into gate/bias halves so the kernel never slices the lane axis."""
    h = jnp.dot(state_ref[...], w1_ref[...], preferred_element_type=jnp.float32)
    h = jnp.maximum(h + b1_ref[...].astype(jnp.float32), 0.0)
    h = h.astype(w2g_ref.dtype)
    gate = jnp.dot(h, w2g_ref[...], preferred_element_type=jnp.float32)
    gate = gate + b2g_ref[...].astype(jnp.float32)
    bias = jnp.dot(h, w2b_ref[...], preferred_element_type=jnp.float32)
    bias = bias + b2b_ref[...].astype(jnp.float32)
    z = _sigmoid(gate, approx_sigmoid)
    out_ref[...] = (inp_ref[...].astype(jnp.float32) * z + bias).astype(out_ref.dtype)


# ---------------------------------------------------------------------------
# VMEM budgeting / tile selection
# ---------------------------------------------------------------------------

def _round_up(x, m):
    return (x + m - 1) // m * m


def _vmem_capacity_bytes():
    try:
        return int(getattr(pltpu.get_tpu_info(), "vmem_capacity_bytes", 64 << 20))
    except Exception:
        return 64 << 20           # conservative: fits v7x's 64 MiB per-TC VMEM


def _resident_weight_bytes(dims, hidden, w_itemsize):
    # w1 + w2 (both halves) + b1 + b2; single pipeline buffer (pl.Buffered(1)).
    return (dims * hidden + hidden * 2 * dims + hidden + 2 * dims) * w_itemsize


def _per_row_bytes(dims, hidden, act_itemsize):
    # 3 activation streams (state, input_, out) x 2 pipeline buffers in the
    # I/O dtype, plus f32 intermediates: h [hidden], FC2 result [2*dims], z [dims].
    return 3 * 2 * dims * act_itemsize + (hidden + 3 * dims) * 4


def _choose_tile_n(n, dims, hidden, act_itemsize, w_itemsize, align):
    cap = _vmem_capacity_bytes()
    budget = int(cap * 0.7)       # headroom for Mosaic internal scratch / spills
    avail = budget - _resident_weight_bytes(dims, hidden, w_itemsize)
    tile = max(align, avail // max(_per_row_bytes(dims, hidden, act_itemsize), 1))
    # Keep >= 2 grid steps when the batch allows it so v7x megacore sharding
    # engages (negligible extra per-step overhead on single-TC v5e/v6e).
    half = _round_up(max((n + 1) // 2, 1), align)
    tile = min(tile, half)
    tile = max(align, (tile // align) * align)
    return int(tile)


def _vmem_limit_bytes(tile_n, dims, hidden, act_itemsize, w_itemsize):
    cap = _vmem_capacity_bytes()
    footprint = (_resident_weight_bytes(dims, hidden, w_itemsize)
                 + tile_n * _per_row_bytes(dims, hidden, act_itemsize))
    limit = max(footprint + (8 << 20), 32 << 20)   # margin for compiler temps
    return int(min(limit, int(cap * 0.9)))


# ---------------------------------------------------------------------------
# Public wrapper
# ---------------------------------------------------------------------------

def linear_se(state, input_, w1, b1, w2, b2, *, tile_n=None, approx_sigmoid=True):
    """state, input_: [N, dims]; w1: [dims, hidden]; b1: [hidden];
    w2: [hidden, 2*dims]; b2: [2*dims]  ->  out: [N, dims] in input_.dtype.

    Production guidance: run state/input_/out in bf16 — the kernel is HBM-bound
    (~hidden/2 flops/byte), so halving bytes on the dominant streams is ~2x wall
    clock; all matmuls accumulate in f32 inside the kernel.
    """
    n, dims = state.shape
    hidden = w1.shape[1]
    assert input_.shape == (n, dims)
    assert w1.shape == (dims, hidden)
    assert w2.shape == (hidden, 2 * dims)
    assert b1.shape[-1] == hidden and b2.shape[-1] == 2 * dims

    b1 = b1.reshape(1, hidden)
    b2 = b2.reshape(1, 2 * dims)

    act_itemsize = jnp.dtype(state.dtype).itemsize
    w_itemsize = jnp.dtype(w1.dtype).itemsize
    align = max(8, 32 // max(act_itemsize, 1))   # 8 rows f32, 16 bf16, 32 int8

    if tile_n is None:
        tile_n = _choose_tile_n(n, dims, hidden, act_itemsize, w_itemsize, align)
    assert tile_n % align == 0, "tile_n must respect the sublane tiling"

    grid = (pl.cdiv(n, tile_n),)
    vmem_limit = _vmem_limit_bytes(tile_n, dims, hidden, act_itemsize, w_itemsize)

    if dims % 128 == 0:
        kernel = partial(_linear_se_kernel_fused, approx_sigmoid=approx_sigmoid)
        operands = (state, input_, w1, b1, w2, b2)
        weight_shapes = [(dims, hidden), (1, hidden),
                         (hidden, 2 * dims), (1, 2 * dims)]
    else:
        # TODO(synk): for production shapes, pad the feature axis to a multiple
        # of 128 at weight-prep time so output stores stay lane-dense (vst, not
        # masked vst.msk).
        kernel = partial(_linear_se_kernel_split, approx_sigmoid=approx_sigmoid)
        operands = (state, input_, w1, b1, w2[:, :dims], w2[:, dims:],
                    b2[:, :dims], b2[:, dims:])
        weight_shapes = [(dims, hidden), (1, hidden), (hidden, dims),
                         (hidden, dims), (1, dims), (1, dims)]

    act_spec = pl.BlockSpec((tile_n, dims), lambda i: (i, 0))

    def call(single_buffer_weights):
        if single_buffer_weights:
            # Constant block index keeps the weights VMEM-resident across the
            # whole grid; Buffered(1) drops their second pipeline buffer.
            w_spec = lambda s: pl.BlockSpec(s, lambda i: (0, 0),
                                            pipeline_mode=pl.Buffered(1))
        else:
            w_spec = lambda s: pl.BlockSpec(s, lambda i: (0, 0))
        return pl.pallas_call(
            kernel,
            out_shape=jax.ShapeDtypeStruct((n, dims), input_.dtype),
            grid=grid,
            in_specs=[act_spec, act_spec] + [w_spec(s) for s in weight_shapes],
            out_specs=act_spec,
            compiler_params=pltpu.CompilerParams(
                dimension_semantics=("parallel",),   # megacore sharding on v7x
                vmem_limit_bytes=vmem_limit,
            ),
        )(*operands)

    try:
        return call(single_buffer_weights=True)
    except Exception:
        # Fallback for jax builds where BlockSpec.pipeline_mode isn't plumbed
        # through the classic pallas_call pipeliner: identical semantics, just
        # keeps the default double-buffered (still VMEM-resident) weights.
        return call(single_buffer_weights=False)


# ---------------------------------------------------------------------------
# Reference + self-test
# ---------------------------------------------------------------------------

def _reference(state, input_, w1, b1, w2, b2):
    dims = state.shape[1]
    h = jnp.maximum(state @ w1 + b1, 0.0)
    p = h @ w2 + b2
    return input_ * jax.nn.sigmoid(p[:, :dims]) + p[:, dims:]


if __name__ == "__main__":
    key = jax.random.PRNGKey(0)
    k_state, k_inp, k_w1, k_b1, k_w2, k_b2 = jax.random.split(key, 6)

    # Shapes consistent with LinearSE(dims=128, squeeze_rate=4).
    dims, squeeze_rate = 128, 4
    hidden = dims // squeeze_rate

    w1 = jax.random.uniform(k_w1, (dims, hidden), minval=-1.0, maxval=1.0) / jnp.sqrt(dims)
    b1 = jax.random.uniform(k_b1, (hidden,), minval=-1.0, maxval=1.0) / jnp.sqrt(dims)
    w2 = jax.random.uniform(k_w2, (hidden, 2 * dims), minval=-1.0, maxval=1.0) / jnp.sqrt(hidden)
    b2 = jax.random.uniform(k_b2, (2 * dims,), minval=-1.0, maxval=1.0) / jnp.sqrt(hidden)

    # 1) f32, exact sigmoid, fused FC2 path (strict check).
    state = jax.random.normal(k_state, (8, dims), dtype=jnp.float32)
    input_ = jax.random.normal(k_inp, (8, dims), dtype=jnp.float32)
    out = jax.block_until_ready(
        linear_se(state, input_, w1, b1, w2, b2, approx_sigmoid=False))
    ref = _reference(state, input_, w1, b1, w2, b2)
    assert out.shape == (8, dims)
    assert jnp.allclose(out, ref, atol=1e-5, rtol=1e-5), "f32 mismatch vs reference"

    # 2) f32, default approx (EUP) sigmoid.
    out_a = jax.block_until_ready(linear_se(state, input_, w1, b1, w2, b2))
    assert jnp.allclose(out_a, ref, atol=3e-2), "approx-sigmoid mismatch vs reference"

    # 3) bf16 I/O path (bandwidth lever); f32 accumulation inside the kernel.
    bf = lambda x: x.astype(jnp.bfloat16)
    state_b = jax.random.normal(k_state, (32, dims), dtype=jnp.float32)
    input_b = jax.random.normal(k_inp, (32, dims), dtype=jnp.float32)
    out_bf = jax.block_until_ready(
        linear_se(bf(state_b), bf(input_b), bf(w1), bf(b1), bf(w2), bf(b2)))
    ref_bf = _reference(bf(state_b).astype(jnp.float32), bf(input_b).astype(jnp.float32),
                        bf(w1).astype(jnp.float32), bf(b1).astype(jnp.float32),
                        bf(w2).astype(jnp.float32), bf(b2).astype(jnp.float32))
    assert out_bf.dtype == jnp.bfloat16
    assert jnp.allclose(out_bf.astype(jnp.float32), ref_bf, atol=5e-2, rtol=5e-2), \
        "bf16 mismatch vs reference"

    # 4) Ragged batch with NO host-side pad/slice: n=20, tile_n=8 -> grid=3,
    #    partial last block handled by Pallas masked write-back.
    state_r = jax.random.normal(k_state, (20, dims), dtype=jnp.float32)
    input_r = jax.random.normal(k_inp, (20, dims), dtype=jnp.float32)
    out_r = jax.block_until_ready(
        linear_se(state_r, input_r, w1, b1, w2, b2, tile_n=8, approx_sigmoid=False))
    ref_r = _reference(state_r, input_r, w1, b1, w2, b2)
    assert out_r.shape == (20, dims)
    assert jnp.allclose(out_r, ref_r, atol=1e-5, rtol=1e-5), "ragged-grid mismatch"

    # 5) dims not a multiple of 128 -> split-FC2 kernel path.
    dims2, hidden2 = 96, 24
    w1s = jax.random.uniform(k_w1, (dims2, hidden2), minval=-1.0, maxval=1.0) / jnp.sqrt(dims2)
    b1s = jax.random.uniform(k_b1, (hidden2,), minval=-1.0, maxval=1.0) / jnp.sqrt(dims2)
    w2s = jax.random.uniform(k_w2, (hidden2, 2 * dims2), minval=-1.0, maxval=1.0) / jnp.sqrt(hidden2)
    b2s = jax.random.uniform(k_b2, (2 * dims2,), minval=-1.0, maxval=1.0) / jnp.sqrt(hidden2)
    state_s = jax.random.normal(k_state, (24, dims2), dtype=jnp.float32)
    input_s = jax.random.normal(k_inp, (24, dims2), dtype=jnp.float32)
    out_s = jax.block_until_ready(
        linear_se(state_s, input_s, w1s, b1s, w2s, b2s, approx_sigmoid=False))
    ref_s = _reference(state_s, input_s, w1s, b1s, w2s, b2s)
    assert jnp.allclose(out_s, ref_s, atol=1e-5, rtol=1e-5), "split-FC2 mismatch"

    print("KERNEL_OK")
</pallas_src>

<mosaic_0001>
module attributes {stable_mosaic.version = 11 : i64} {
  func.func @_linear_se_kernel_fused(%arg0: i32, %arg1: memref<8x128xf32, #tpu.memory_space<vmem>>, %arg2: memref<8x128xf32, #tpu.memory_space<vmem>>, %arg3: memref<128x32xf32, #tpu.memory_space<vmem>>, %arg4: memref<1x32xf32, #tpu.memory_space<vmem>>, %arg5: memref<32x256xf32, #tpu.memory_space<vmem>>, %arg6: memref<1x256xf32, #tpu.memory_space<vmem>>, %arg7: memref<8x128xf32, #tpu.memory_space<vmem>>) attributes {dimension_semantics = [#tpu.dimension_semantics<parallel>], iteration_bounds = array<i64: 1>, scalar_prefetch = 0 : i64, scratch_operands = 0 : i64, tpu.core_type = #tpu.core_type<tc>, window_params = [{transform_indices = @transform_0, window_bounds = array<i64: 8, 128>}, {transform_indices = @transform_1, window_bounds = array<i64: 8, 128>}, {pipeline_mode = #tpu.pipeline_mode<synchronous>, transform_indices = @transform_2, window_bounds = array<i64: 128, 32>}, {pipeline_mode = #tpu.pipeline_mode<synchronous>, transform_indices = @transform_3, window_bounds = array<i64: 1, 32>}, {pipeline_mode = #tpu.pipeline_mode<synchronous>, transform_indices = @transform_4, window_bounds = array<i64: 32, 256>}, {pipeline_mode = #tpu.pipeline_mode<synchronous>, transform_indices = @transform_5, window_bounds = array<i64: 1, 256>}, {transform_indices = @transform_6, window_bounds = array<i64: 8, 128>}]} {
    %c0 = arith.constant 0 : index
    %c0_0 = arith.constant 0 : index
    %0 = vector.load %arg1[%c0, %c0_0] : memref<8x128xf32, #tpu.memory_space<vmem>>, vector<8x128xf32>
    %c0_1 = arith.constant 0 : index
    %c0_2 = arith.constant 0 : index
    %1 = vector.load %arg3[%c0_1, %c0_2] : memref<128x32xf32, #tpu.memory_space<vmem>>, vector<128x32xf32>
    %cst = arith.constant dense<0.000000e+00> : vector<8x32xf32>
    %2 = tpu.matmul %0, %1, %cst {dimension_numbers = #tpu.dot_dimension_numbers<[1], [0], [0], [1], [0, 0, 1, 1], [], []>} : vector<8x128xf32>, vector<128x32xf32>, vector<8x32xf32> -> vector<8x32xf32>
    %c0_3 = arith.constant 0 : index
    %c0_4 = arith.constant 0 : index
    %3 = vector.load %arg4[%c0_3, %c0_4] : memref<1x32xf32, #tpu.memory_space<vmem>>, vector<1x32xf32>
    %4 = vector.broadcast %3 : vector<1x32xf32> to vector<8x32xf32>
    %5 = arith.addf %2, %4 : vector<8x32xf32>
    %cst_5 = arith.constant 0.000000e+00 : f32
    %6 = vector.broadcast %cst_5 : f32 to vector<8x32xf32>
    %7 = arith.maximumf %5, %6 : vector<8x32xf32>
    %c0_6 = arith.constant 0 : index
    %c0_7 = arith.constant 0 : index
    %8 = vector.load %arg5[%c0_6, %c0_7] : memref<32x256xf32, #tpu.memory_space<vmem>>, vector<32x256xf32>
    %cst_8 = arith.constant dense<0.000000e+00> : vector<8x256xf32>
    %9 = tpu.matmul %7, %8, %cst_8 {dimension_numbers = #tpu.dot_dimension_numbers<[1], [0], [0], [1], [0, 0, 1, 1], [], []>} : vector<8x32xf32>, vector<32x256xf32>, vector<8x256xf32> -> vector<8x256xf32>
    %c0_9 = arith.constant 0 : index
    %c0_10 = arith.constant 0 : index
    %10 = vector.load %arg6[%c0_9, %c0_10] : memref<1x256xf32, #tpu.memory_space<vmem>>, vector<1x256xf32>
    %11 = vector.broadcast %10 : vector<1x256xf32> to vector<8x256xf32>
    %12 = arith.addf %9, %11 : vector<8x256xf32>
    %13 = vector.extract_strided_slice %12 {offsets = [0, 0], sizes = [8, 128], strides = [1, 1]} : vector<8x256xf32> to vector<8x128xf32>
    %14 = vector.extract_strided_slice %12 {offsets = [0, 128], sizes = [8, 128], strides = [1, 1]} : vector<8x256xf32> to vector<8x128xf32>
    %15 = arith.negf %13 : vector<8x128xf32>
    %16 = math.exp %15 : vector<8x128xf32>
    %cst_11 = arith.constant 1.000000e+00 : f32
    %17 = vector.broadcast %cst_11 : f32 to vector<8x128xf32>
    %18 = arith.addf %17, %16 : vector<8x128xf32>
    %19 = arith.divf %17, %18 : vector<8x128xf32>
    %c0_12 = arith.constant 0 : index
    %c0_13 = arith.constant 0 : index
    %20 = vector.load %arg2[%c0_12, %c0_13] : memref<8x128xf32, #tpu.memory_space<vmem>>, vector<8x128xf32>
    %21 = arith.mulf %20, %19 : vector<8x128xf32>
    %22 = arith.addf %21, %14 : vector<8x128xf32>
    %c0_14 = arith.constant 0 : index
    %c0_15 = arith.constant 0 : index
    %23 = vector.load %arg7[%c0_14, %c0_15] : memref<8x128xf32, #tpu.memory_space<vmem>>, vector<8x128xf32>
    tpu.vector_store %arg7[%c0_14, %c0_15], %22 {strides = array<i32>} : memref<8x128xf32, #tpu.memory_space<vmem>>, vector<8x128xf32>,
    return
  }
  func.func @transform_0(%arg0: i32) -> (i32, i32) {
    %c0_i32 = arith.constant 0 : i32
    %c0_i32_0 = arith.constant 0 : i32
    return %arg0, %c0_i32 : i32, i32
  }
  func.func @transform_1(%arg0: i32) -> (i32, i32) {
    %c0_i32 = arith.constant 0 : i32
    %c0_i32_0 = arith.constant 0 : i32
    return %arg0, %c0_i32 : i32, i32
  }
  func.func @transform_2(%arg0: i32) -> (i32, i32) {
    %c0_i32 = arith.constant 0 : i32
    %c0_i32_0 = arith.constant 0 : i32
    %c0_i32_1 = arith.constant 0 : i32
    return %c0_i32, %c0_i32_0 : i32, i32
  }
  func.func @transform_3(%arg0: i32) -> (i32, i32) {
    %c0_i32 = arith.constant 0 : i32
    %c0_i32_0 = arith.constant 0 : i32
    %c0_i32_1 = arith.constant 0 : i32
    return %c0_i32, %c0_i32_0 : i32, i32
  }
  func.func @transform_4(%arg0: i32) -> (i32, i32) {
    %c0_i32 = arith.constant 0 : i32
    %c0_i32_0 = arith.constant 0 : i32
    %c0_i32_1 = arith.constant 0 : i32
    return %c0_i32, %c0_i32_0 : i32, i32
  }
  func.func @transform_5(%arg0: i32) -> (i32, i32) {
    %c0_i32 = arith.constant 0 : i32
    %c0_i32_0 = arith.constant 0 : i32
    %c0_i32_1 = arith.constant 0 : i32
    return %c0_i32, %c0_i32_0 : i32, i32
  }
  func.func @transform_6(%arg0: i32) -> (i32, i32) {
    %c0_i32 = arith.constant 0 : i32
    %c0_i32_0 = arith.constant 0 : i32
    return %arg0, %c0_i32 : i32, i32
  }
}

module attributes {stable_mosaic.version = 11 : i64} {
  func.func @_linear_se_kernel_fused(%arg0: i32, %arg1: memref<8x128xf32, #tpu.memory_space<vmem>>, %arg2: memref<8x128xf32, #tpu.memory_space<vmem>>, %arg3: memref<128x32xf32, #tpu.memory_space<vmem>>, %arg4: memref<1x32xf32, #tpu.memory_space<vmem>>, %arg5: memref<32x256xf32, #tpu.memory_space<vmem>>, %arg6: memref<1x256xf32, #tpu.memory_space<vmem>>, %arg7: memref<8x128xf32, #tpu.memory_space<vmem>>) attributes {dimension_semantics = [#tpu.dimension_semantics<parallel>], iteration_bounds = array<i64: 1>, scalar_prefetch = 0 : i64, scratch_operands = 0 : i64, tpu.core_type = #tpu.core_type<tc>, window_params = [{transform_indices = @transform_0, window_bounds = array<i64: 8, 128>}, {transform_indices = @transform_1, window_bounds = array<i64: 8, 128>}, {pipeline_mode = #tpu.pipeline_mode<synchronous>, transform_indices = @transform_2, window_bounds = array<i64: 128, 32>}, {pipeline_mode = #tpu.pipeline_mode<synchronous>, transform_indices = @transform_3, window_bounds = array<i64: 1, 32>}, {pipeline_mode = #tpu.pipeline_mode<synchronous>, transform_indices = @transform_4, window_bounds = array<i64: 32, 256>}, {pipeline_mode = #tpu.pipeline_mode<synchronous>, transform_indices = @transform_5, window_bounds = array<i64: 1, 256>}, {transform_indices = @transform_6, window_bounds = array<i64: 8, 128>}]} {
    %c0 = arith.constant 0 : index
    %c0_0 = arith.constant 0 : index
    %0 = vector.load %arg1[%c0, %c0_0] : memref<8x128xf32, #tpu.memory_space<vmem>>, vector<8x128xf32>
    %c0_1 = arith.constant 0 : index
    %c0_2 = arith.constant 0 : index
    %1 = vector.load %arg3[%c0_1, %c0_2] : memref<128x32xf32, #tpu.memory_space<vmem>>, vector<128x32xf32>
    %cst = arith.constant dense<0.000000e+00> : vector<8x32xf32>
    %2 = tpu.matmul %0, %1, %cst {dimension_numbers = #tpu.dot_dimension_numbers<[1], [0], [0], [1], [0, 0, 1, 1], [], []>} : vector<8x128xf32>, vector<128x32xf32>, vector<8x32xf32> -> vector<8x32xf32>
    %c0_3 = arith.constant 0 : index
    %c0_4 = arith.constant 0 : index
    %3 = vector.load %arg4[%c0_3, %c0_4] : memref<1x32xf32, #tpu.memory_space<vmem>>, vector<1x32xf32>
    %4 = vector.broadcast %3 : vector<1x32xf32> to vector<8x32xf32>
    %5 = arith.addf %2, %4 : vector<8x32xf32>
    %cst_5 = arith.constant 0.000000e+00 : f32
    %6 = vector.broadcast %cst_5 : f32 to vector<8x32xf32>
    %7 = arith.maximumf %5, %6 : vector<8x32xf32>
    %c0_6 = arith.constant 0 : index
    %c0_7 = arith.constant 0 : index
    %8 = vector.load %arg5[%c0_6, %c0_7] : memref<32x256xf32, #tpu.memory_space<vmem>>, vector<32x256xf32>
    %cst_8 = arith.constant dense<0.000000e+00> : vector<8x256xf32>
    %9 = tpu.matmul %7, %8, %cst_8 {dimension_numbers = #tpu.dot_dimension_numbers<[1], [0], [0], [1], [0, 0, 1, 1], [], []>} : vector<8x32xf32>, vector<32x256xf32>, vector<8x256xf32> -> vector<8x256xf32>
    %c0_9 = arith.constant 0 : index
    %c0_10 = arith.constant 0 : index
    %10 = vector.load %arg6[%c0_9, %c0_10] : memref<1x256xf32, #tpu.memory_space<vmem>>, vector<1x256xf32>
    %11 = vector.broadcast %10 : vector<1x256xf32> to vector<8x256xf32>
    %12 = arith.addf %9, %11 : vector<8x256xf32>
    %13 = vector.extract_strided_slice %12 {offsets = [0, 0], sizes = [8, 128], strides = [1, 1]} : vector<8x256xf32> to vector<8x128xf32>
    %14 = vector.extract_strided_slice %12 {offsets = [0, 128], sizes = [8, 128], strides = [1, 1]} : vector<8x256xf32> to vector<8x128xf32>
    %15 = arith.negf %13 : vector<8x128xf32>
    %16 = math.exp %15 : vector<8x128xf32>
    %cst_11 = arith.constant 1.000000e+00 : f32
    %17 = vector.broadcast %cst_11 : f32 to vector<8x128xf32>
    %18 = arith.addf %17, %16 : vector<8x128xf32>
    %19 = arith.divf %17, %18 : vector<8x128xf32>
    %c0_12 = arith.constant 0 : index
    %c0_13 = arith.constant 0 : index
    %20 = vector.load %arg2[%c0_12, %c0_13] : memref<8x128xf32, #tpu.memory_space<vmem>>, vector<8x128xf32>
    %21 = arith.mulf %20, %19 : vector<8x128xf32>
    %22 = arith.addf %21, %14 : vector<8x128xf32>
    %c0_14 = arith.constant 0 : index
    %c0_15 = arith.constant 0 : index
    %23 = vector.load %arg7[%c0_14, %c0_15] : memref<8x128xf32, #tpu.memory_space<vmem>>, vector<8x128xf32>
    tpu.vector_store %arg7[%c0_14, %c0_15], %22 {strides = array<i32>} : memref<8x128xf32, #tpu.memory_space<vmem>>, vector<8x128xf32>,
    return
  }
  func.func @transform_0(%arg0: i32) -> (i32, i32) {
    %c0_i32 = arith.constant 0 : i32
    %c0_i32_0 = arith.constant 0 : i32
    return %arg0, %c0_i32 : i32, i32
  }
  func.func @transform_1(%arg0: i32) -> (i32, i32) {
    %c0_i32 = arith.constant 0 : i32
    %c0_i32_0 = arith.constant 0 : i32
    return %arg0, %c0_i32 : i32, i32
  }
  func.func @transform_2(%arg0: i32) -> (i32, i32) {
    %c0_i32 = arith.constant 0 : i32
    %c0_i32_0 = arith.constant 0 : i32
    %c0_i32_1 = arith.constant 0 : i32
    return %c0_i32, %c0_i32_0 : i32, i32
  }
  func.func @transform_3(%arg0: i32) -> (i32, i32) {
    %c0_i32 = arith.constant 0 : i32
    %c0_i32_0 = arith.constant 0 : i32
    %c0_i32_1 = arith.constant 0 : i32
    return %c0_i32, %c0_i32_0 : i32, i32
  }
  func.func @transform_4(%arg0: i32) -> (i32, i32) {
    %c0_i32 = arith.constant 0 : i32
    %c0_i32_0 = arith.constant 0 : i32
    %c0_i32_1 = arith.constant 0 : i32
    return %c0_i32, %c0_i32_0 : i32, i32
  }
  func.func @transform_5(%arg0: i32) -> (i32, i32) {
    %c0_i32 = arith.constant 0 : i32
    %c0_i32_0 = arith.constant 0 : i32
    %c0_i32_1 = arith.constant 0 : i32
    return %c0_i32, %c0_i32_0 : i32, i32
  }
  func.func @transform_6(%arg0: i32) -> (i32, i32) {
    %c0_i32 = arith.constant 0 : i32
    %c0_i32_0 = arith.constant 0 : i32
    return %arg0, %c0_i32 : i32, i32
  }
}

</mosaic_0001>

<llo_original>
// kernel: tpu_custom_call.1
$region0: #{tpu_custom_call.1}
  #allocation0 [shape = 'u32[]', space=smem, size = 0x4, offset = 0x4, fixed_abs, tag = 'smem constant byte address 0x4 - core index']
  #allocation1 [shape = 'u32[144,128]{1,0:T(1,128)}', space=vmem, size = 0x12000, scoped, tag = 'internal scratch']
  %s0 = inlined_call_operand.vmem [shape: f32[8,128], index: 0, kind: input, shape index: {}]
  %s1 = inlined_call_operand.vmem [shape: f32[8,128], index: 1, kind: input, shape index: {}]
  %s2 = inlined_call_operand.vmem [shape: f32[128,32], index: 2, kind: input, shape index: {}]
  %s3 = inlined_call_operand.vmem [shape: f32[1,32], index: 3, kind: input, shape index: {}]
  %s4 = inlined_call_operand.vmem [shape: f32[32,256], index: 4, kind: input, shape index: {}]
  %s5 = inlined_call_operand.vmem [shape: f32[1,256], index: 5, kind: input, shape index: {}]
  %s6 = inlined_call_operand.hbm [shape: f32[8,128], index: 6, kind: output, shape index: {}]
  %s7 = sld [smem:[#allocation0]]
  $region34: #{tpu_custom_call.1} parent=0
    _
  %s9 = ssub.s32 1, %s7
  %s10 = scalar_select 0, %s9, %s7
  $region1: #{tpu_custom_call.1} parent=0
    #allocation2 [shape = 'u8[4096]{0}', space=vmem, size = 0x1000, scoped, tag = 'output window, operand 0, single buffered']
    #allocation3 [shape = 's32[1]{0}', space=sflag, size = 0x4, scoped, tag = 'scoped memory for tpu_custom_call.1']
    %11 = vsyncpa [#allocation3], 0
    // Predicated region
    $region2: #{tpu_custom_call.1} parent=1 // pred_check
      _
    $region3: #{tpu_custom_call.1} parent=1 // pred_check_branch
      %13 = sbr.rel (0) target = $region5
    $region4: #{tpu_custom_call.1} parent=1 // pred_region
      _
    $region5: #{tpu_custom_call.1} parent=1 // pred_fallthru
      _
    // Predicated region
    $region6: #{tpu_custom_call.1} parent=1 // pred_check
      _
    $region7: #{tpu_custom_call.1} parent=1 // pred_check_branch
      %15 = sbr.rel (0) target = $region9
    $region8: #{tpu_custom_call.1} parent=1 // pred_region
      _
    $region9: #{tpu_custom_call.1} parent=1 // pred_fallthru
      _
    // Predicated region
    $region10: #{tpu_custom_call.1} parent=1 // pred_check
      _
    $region11: #{tpu_custom_call.1} parent=1 // pred_check_branch
      %17 = sbr.rel (0) target = $region13
    $region12: #{tpu_custom_call.1} parent=1 // pred_region
      _
    $region13: #{tpu_custom_call.1} parent=1 // pred_fallthru
      _
    // Predicated region
    $region14: #{tpu_custom_call.1} parent=1 // pred_check
      _
    $region15: #{tpu_custom_call.1} parent=1 // pred_check_branch
      %19 = sbr.rel (0) target = $region17
    $region16: #{tpu_custom_call.1} parent=1 // pred_region
      _
    $region17: #{tpu_custom_call.1} parent=1 // pred_fallthru
      _
    // Predicated region
    $region18: #{tpu_custom_call.1} parent=1 // pred_check
      _
    $region19: #{tpu_custom_call.1} parent=1 // pred_check_branch
      %21 = sbr.rel (0) target = $region21
    $region20: #{tpu_custom_call.1} parent=1 // pred_region
      _
    $region21: #{tpu_custom_call.1} parent=1 // pred_fallthru
      _
    // Predicated region
    $region22: #{tpu_custom_call.1} parent=1 // pred_check
      _
    $region23: #{tpu_custom_call.1} parent=1 // pred_check_branch
      %23 = sbr.rel (0) target = $region25
    $region24: #{tpu_custom_call.1} parent=1 // pred_region
      _
    $region25: #{tpu_custom_call.1} parent=1 // pred_fallthru
      _
    %v24 = vld [vmem:[%s0] sm:$0xff]
    %v25 = vld [vmem:[%s2] sm:$0xff]
    %v26 = vld [vmem:[%s2 + $0x8] sm:$0xff]
    %v27 = vld [vmem:[%s2 + $0x10] sm:$0xff]
    %v28 = vld [vmem:[%s2 + $0x18] sm:$0xff]
    %v29 = vld [vmem:[%s2 + $0x20] sm:$0xff]
    %v30 = vld [vmem:[%s2 + $0x28] sm:$0xff]
    %v31 = vld [vmem:[%s2 + $0x30] sm:$0xff]
    %v32 = vld [vmem:[%s2 + $0x38] sm:$0xff]
    %v33 = vld [vmem:[%s2 + $0x40] sm:$0xff]
    %v34 = vld [vmem:[%s2 + $0x48] sm:$0xff]
    %v35 = vld [vmem:[%s2 + $0x50] sm:$0xff]
    %v36 = vld [vmem:[%s2 + $0x58] sm:$0xff]
    %v37 = vld [vmem:[%s2 + $0x60] sm:$0xff]
    %v38 = vld [vmem:[%s2 + $0x68] sm:$0xff]
    %v39 = vld [vmem:[%s2 + $0x70] sm:$0xff]
    %v40 = vld [vmem:[%s2 + $0x78] sm:$0xff]
    %v41 = vld [vmem:[%s3] sm:$0x1]
    %v43 = vlaneseq
    %v44 = vshrl.u32 %v43, 7
    %v45 = vsub.s32 0, %v44
    %v46 = vrot.slane %v41, %v45
    %48 = vmatprep.subr.mxu0 0.0
    %49 = vmatpush1.msra.mxu0 %v40
    %50 = vmatprep.subr.mxu0 0.0
    %51 = vmatpush1.msra.mxu0 %v39
    %52 = vmatprep.subr.mxu0 0.0
    %53 = vmatpush1.msra.mxu0 %v38
    %54 = vmatprep.subr.mxu0 0.0
    %55 = vmatpush1.msra.mxu0 %v37
    %56 = vmatprep.subr.mxu0 0.0
    %57 = vmatpush1.msra.mxu0 %v36
    %58 = vmatprep.subr.mxu0 0.0
    %59 = vmatpush1.msra.mxu0 %v35
    %60 = vmatprep.subr.mxu0 0.0
    %61 = vmatpush1.msra.mxu0 %v34
    %62 = vmatprep.subr.mxu0 0.0
    %63 = vmatpush1.msra.mxu0 %v33
    %64 = vmatprep.subr.mxu0 0.0
    %65 = vmatpush1.msra.mxu0 %v32
    %66 = vmatprep.subr.mxu0 0.0
    %67 = vmatpush1.msra.mxu0 %v31
    %68 = vmatprep.subr.mxu0 0.0
    %69 = vmatpush1.msra.mxu0 %v30
    %70 = vmatprep.subr.mxu0 0.0
    %71 = vmatpush1.msra.mxu0 %v29
    %72 = vmatprep.subr.mxu0 0.0
    %73 = vmatpush1.msra.mxu0 %v28
    %74 = vmatprep.subr.mxu0 0.0
    %75 = vmatpush1.msra.mxu0 %v27
    %76 = vmatprep.subr.mxu0 0.0
    %77 = vmatpush1.msra.mxu0 %v26
    %78 = vmatprep.subr.mxu0 0.0
    %79 = vmatpush1.msra.mxu0 %v25
    %80 = vmatprep.subr.mxu0 0.0
    %81 = vmatpush2.msra.mxu0 0.0
    %82 = vmatprep.subr.mxu0 0.0
    %83 = vmatpush2.msra.mxu0 0.0
    %84 = vmatprep.subr.mxu0 0.0
    %85 = vmatpush2.msra.mxu0 0.0
    %86 = vmatprep.subr.mxu0 0.0
    %87 = vmatpush2.msra.mxu0 0.0
    %88 = vmatprep.subr.mxu0 0.0
    %89 = vmatpush2.msra.mxu0 0.0
    %90 = vmatprep.subr.mxu0 0.0
    %91 = vmatpush2.msra.mxu0 0.0
    %92 = vmatprep.subr.mxu0 0.0
    %93 = vmatpush2.msra.mxu0 0.0
    %94 = vmatprep.subr.mxu0 0.0
    %95 = vmatpush2.msra.mxu0 0.0
    %96 = vmatprep.subr.mxu0 0.0
    %97 = vmatpush2.msra.mxu0 0.0
    %98 = vmatprep.subr.mxu0 0.0
    %99 = vmatpush2.msra.mxu0 0.0
    %100 = vmatprep.subr.mxu0 0.0
    %101 = vmatpush2.msra.mxu0 0.0
    %102 = vmatprep.subr.mxu0 0.0
    %103 = vmatpush2.msra.mxu0 0.0
    %104 = vmatprep.subr.mxu0 0.0
    %105 = vmatpush2.msra.mxu0 0.0
    %106 = vmatprep.subr.mxu0 0.0
    %107 = vmatpush2.msra.mxu0 0.0
    %108 = vmatprep.subr.mxu0 0.0
    %109 = vmatpush2.msra.mxu0 0.0
    %110 = vmatprep.subr.mxu0 0.0
    %111 = vmatpush2.msra.mxu0 0.0
    %112 = vmatprep.mubr.f32.mxu0 0.0
    %113 = vmatmul.mubr.f32.gmra.mxu0 %v24
    %v114 = vpop.f32.mrf.mxu0
    %v115 = vadd.f32 %v46, %v114
    %v116 = vpop.f32.mrf.mxu0
    %117 = vdwg.mxu0
    %v118 = vmax.f32 %v115, 0.0
    %v119 = vld [vmem:[%s4] sm:$0xff]
    %v120 = vld [vmem:[%s4 + $0x8] sm:$0xff]
    %v121 = vld [vmem:[%s4 + $0x10] sm:$0xff]
    %v122 = vld [vmem:[%s4 + $0x18] sm:$0xff]
    %v123 = vld [vmem:[%s4 + $0x20] sm:$0xff]
    %v124 = vld [vmem:[%s4 + $0x28] sm:$0xff]
    %v125 = vld [vmem:[%s4 + $0x30] sm:$0xff]
    %v126 = vld [vmem:[%s4 + $0x38] sm:$0xff]
    %v127 = vld [vmem:[%s5] sm:$0x3]
    %v129 = vlaneseq
    %v130 = vshrl.u32 %v129, 7
    %v131 = vsub.s32 0, %v130
    %v132 = vrot.slane %v127, %v131
    %v133 = vlaneseq
    %v134 = vshrl.u32 %v133, 7
    %v135 = vsub.s32 1, %v134
    %v136 = vrot.slane %v127, %v135
    %vm139 = vcmask 261120
    %v141 = vsel %vm139, %v118, 0
    %143 = vmatprep.subr.mxu0 0.0
    %144 = vmatpush1.msra.mxu0 0.0
    %145 = vmatprep.subr.mxu0 0.0
    %146 = vmatpush1.msra.mxu0 0.0
    %147 = vmatprep.subr.mxu0 0.0
    %148 = vmatpush1.msra.mxu0 0.0
    %149 = vmatprep.subr.mxu0 0.0
    %150 = vmatpush1.msra.mxu0 0.0
    %151 = vmatprep.subr.mxu0 0.0
    %152 = vmatpush1.msra.mxu0 0.0
    %153 = vmatprep.subr.mxu0 0.0
    %154 = vmatpush1.msra.mxu0 0.0
    %155 = vmatprep.subr.mxu0 0.0
    %156 = vmatpush1.msra.mxu0 0.0
    %157 = vmatprep.subr.mxu0 0.0
    %158 = vmatpush1.msra.mxu0 0.0
    %159 = vmatprep.subr.mxu0 0.0
    %160 = vmatpush1.msra.mxu0 0.0
    %161 = vmatprep.subr.mxu0 0.0
    %162 = vmatpush1.msra.mxu0 0.0
    %163 = vmatprep.subr.mxu0 0.0
    %164 = vmatpush1.msra.mxu0 0.0
    %165 = vmatprep.subr.mxu0 0.0
    %166 = vmatpush1.msra.mxu0 0.0
    %167 = vmatprep.subr.mxu0 %v126
    %168 = vmatpush1.msra.mxu0 %v125
    %169 = vmatprep.subr.mxu0 %v124
    %170 = vmatpush1.msra.mxu0 %v123
    %171 = vmatprep.subr.mxu0 %v122
    %172 = vmatpush1.msra.mxu0 %v121
    %173 = vmatprep.subr.mxu0 %v120
    %174 = vmatpush1.msra.mxu0 %v119
    %175 = vmatprep.subr.mxu0 0.0
    %176 = vmatpush2.msra.mxu0 0.0
    %177 = vmatprep.subr.mxu0 0.0
    %178 = vmatpush2.msra.mxu0 0.0
    %179 = vmatprep.subr.mxu0 0.0
    %180 = vmatpush2.msra.mxu0 0.0
    %181 = vmatprep.subr.mxu0 0.0
    %182 = vmatpush2.msra.mxu0 0.0
    %183 = vmatprep.subr.mxu0 0.0
    %184 = vmatpush2.msra.mxu0 0.0
    %185 = vmatprep.subr.mxu0 0.0
    %186 = vmatpush2.msra.mxu0 0.0
    %187 = vmatprep.subr.mxu0 0.0
    %188 = vmatpush2.msra.mxu0 0.0
    %189 = vmatprep.subr.mxu0 0.0
    %190 = vmatpush2.msra.mxu0 0.0
    %191 = vmatprep.subr.mxu0 0.0
    %192 = vmatpush2.msra.mxu0 0.0
    %193 = vmatprep.subr.mxu0 0.0
    %194 = vmatpush2.msra.mxu0 0.0
    %195 = vmatprep.subr.mxu0 0.0
    %196 = vmatpush2.msra.mxu0 0.0
    %197 = vmatprep.subr.mxu0 0.0
    %198 = vmatpush2.msra.mxu0 0.0
    %199 = vmatprep.subr.mxu0 0.0
    %200 = vmatpush2.msra.mxu0 0.0
    %201 = vmatprep.subr.mxu0 0.0
    %202 = vmatpush2.msra.mxu0 0.0
    %203 = vmatprep.subr.mxu0 0.0
    %204 = vmatpush2.msra.mxu0 0.0
    %205 = vmatprep.subr.mxu0 0.0
    %206 = vmatpush2.msra.mxu0 0.0
    %207 = vmatprep.mubr.f32.mxu0 0.0
    %208 = vmatmul.mubr.f32.gmra.mxu0 %v141
    %v209 = vpop.f32.mrf.mxu0
    %v210 = vadd.f32 %v132, %v209
    %v211 = vpop.f32.mrf.mxu0
    %v212 = vadd.f32 %v136, %v211
    %213 = vdwg.mxu0
    %v214 = vxor.u32 %v210, 2147483648
    %v215 = vmul.f32 %v214, 1.442695
    %v216 = vpow.pop %v215
    %v217 = vadd.f32 %v216, 1.0
    %v218 = vrcp.pop %v217
    %v219 = vmul.f32 1.0, %v218
    %v220 = vld [vmem:[%s1] sm:$0xff]
    %v221 = vmul.f32 %v220, %v219
    %v222 = vadd.f32 %v221, %v212
    %223 = vst [vmem:[#allocation2] sm:$0xff] %v222
    // Predicated region
    $region26: #{tpu_custom_call.1} parent=1 // pred_check
      _
    $region27: #{tpu_custom_call.1} parent=1 // pred_check_branch
      %225 = sbr.rel (0) target = $region29
    $region28: #{tpu_custom_call.1} parent=1 // pred_region
      %s227 = ssub.s32 128, 128
      %228 = vsyncadd [#allocation3], %s227
      %s230 = sshll.u32 [#allocation2], 4
      %s231 = int_to_ptr.vmem [resolvable:$true] %s230
      %233 = dma.vmem_to_hbm [thread:$0]  %s231, 128, %s6, [#allocation3]
    $region29: #{tpu_custom_call.1} parent=1 // pred_fallthru
      _
    // Predicated region
    $region30: #{tpu_custom_call.1} parent=1 // pred_check
      _
    $region31: #{tpu_custom_call.1} parent=1 // pred_check_branch
      %235 = sbr.rel (0) target = $region33
    $region32: #{tpu_custom_call.1} parent=1 // pred_region
      %236 = dma.done [#allocation3], 128
    $region33: #{tpu_custom_call.1} parent=1 // pred_fallthru
      _
    %237 = vsyncpa [#allocation3], 1

// kernel: tpu_custom_call.1
$region0: #{tpu_custom_call.1}
  #allocation0 [shape = 'u32[]', space=smem, size = 0x4, offset = 0x4, fixed_abs, tag = 'smem constant byte address 0x4 - core index']
  #allocation1 [shape = 'u32[144,128]{1,0:T(1,128)}', space=vmem, size = 0x12000, scoped, tag = 'internal scratch']
  %s0 = inlined_call_operand.vmem [shape: f32[8,128], index: 0, kind: input, shape index: {}]
  %s1 = inlined_call_operand.vmem [shape: f32[8,128], index: 1, kind: input, shape index: {}]
  %s2 = inlined_call_operand.vmem [shape: f32[128,32], index: 2, kind: input, shape index: {}]
  %s3 = inlined_call_operand.vmem [shape: f32[1,32], index: 3, kind: input, shape index: {}]
  %s4 = inlined_call_operand.vmem [shape: f32[32,256], index: 4, kind: input, shape index: {}]
  %s5 = inlined_call_operand.vmem [shape: f32[1,256], index: 5, kind: input, shape index: {}]
  %s6 = inlined_call_operand.hbm [shape: f32[8,128], index: 6, kind: output, shape index: {}]
  %s7 = sld [smem:[#allocation0]]
  $region34: #{tpu_custom_call.1} parent=0
    _
  %s9 = ssub.s32 1, %s7
  %s10 = scalar_select 0, %s9, %s7
  $region1: #{tpu_custom_call.1} parent=0
    #allocation2 [shape = 'u8[4096]{0}', space=vmem, size = 0x1000, scoped, tag = 'output window, operand 0, single buffered']
    #allocation3 [shape = 's32[1]{0}', space=sflag, size = 0x4, scoped, tag = 'scoped memory for tpu_custom_call.1']
    %11 = vsyncpa [#allocation3], 0
    // Predicated region
    $region2: #{tpu_custom_call.1} parent=1 // pred_check
      _
    $region3: #{tpu_custom_call.1} parent=1 // pred_check_branch
      %13 = sbr.rel (0) target = $region5
    $region4: #{tpu_custom_call.1} parent=1 // pred_region
      _
    $region5: #{tpu_custom_call.1} parent=1 // pred_fallthru
      _
    // Predicated region
    $region6: #{tpu_custom_call.1} parent=1 // pred_check
      _
    $region7: #{tpu_custom_call.1} parent=1 // pred_check_branch
      %15 = sbr.rel (0) target = $region9
    $region8: #{tpu_custom_call.1} parent=1 // pred_region
      _
    $region9: #{tpu_custom_call.1} parent=1 // pred_fallthru
      _
    // Predicated region
    $region10: #{tpu_custom_call.1} parent=1 // pred_check
      _
    $region11: #{tpu_custom_call.1} parent=1 // pred_check_branch
      %17 = sbr.rel (0) target = $region13
    $region12: #{tpu_custom_call.1} parent=1 // pred_region
      _
    $region13: #{tpu_custom_call.1} parent=1 // pred_fallthru
      _
    // Predicated region
    $region14: #{tpu_custom_call.1} parent=1 // pred_check
      _
    $region15: #{tpu_custom_call.1} parent=1 // pred_check_branch
      %19 = sbr.rel (0) target = $region17
    $region16: #{tpu_custom_call.1} parent=1 // pred_region
      _
    $region17: #{tpu_custom_call.1} parent=1 // pred_fallthru
      _
    // Predicated region
    $region18: #{tpu_custom_call.1} parent=1 // pred_check
      _
    $region19: #{tpu_custom_call.1} parent=1 // pred_check_branch
      %21 = sbr.rel (0) target = $region21
    $region20: #{tpu_custom_call.1} parent=1 // pred_region
      _
    $region21: #{tpu_custom_call.1} parent=1 // pred_fallthru
      _
    // Predicated region
    $region22: #{tpu_custom_call.1} parent=1 // pred_check
      _
    $region23: #{tpu_custom_call.1} parent=1 // pred_check_branch
      %23 = sbr.rel (0) target = $region25
    $region24: #{tpu_custom_call.1} parent=1 // pred_region
      _
    $region25: #{tpu_custom_call.1} parent=1 // pred_fallthru
      _
    %v24 = vld [vmem:[%s0] sm:$0xff]
    %v25 = vld [vmem:[%s2] sm:$0xff]
    %v26 = vld [vmem:[%s2 + $0x8] sm:$0xff]
    %v27 = vld [vmem:[%s2 + $0x10] sm:$0xff]
    %v28 = vld [vmem:[%s2 + $0x18] sm:$0xff]
    %v29 = vld [vmem:[%s2 + $0x20] sm:$0xff]
    %v30 = vld [vmem:[%s2 + $0x28] sm:$0xff]
    %v31 = vld [vmem:[%s2 + $0x30] sm:$0xff]
    %v32 = vld [vmem:[%s2 + $0x38] sm:$0xff]
    %v33 = vld [vmem:[%s2 + $0x40] sm:$0xff]
    %v34 = vld [vmem:[%s2 + $0x48] sm:$0xff]
    %v35 = vld [vmem:[%s2 + $0x50] sm:$0xff]
    %v36 = vld [vmem:[%s2 + $0x58] sm:$0xff]
    %v37 = vld [vmem:[%s2 + $0x60] sm:$0xff]
    %v38 = vld [vmem:[%s2 + $0x68] sm:$0xff]
    %v39 = vld [vmem:[%s2 + $0x70] sm:$0xff]
    %v40 = vld [vmem:[%s2 + $0x78] sm:$0xff]
    %v41 = vld [vmem:[%s3] sm:$0x1]
    %v43 = vlaneseq
    %v44 = vshrl.u32 %v43, 7
    %v45 = vsub.s32 0, %v44
    %v46 = vrot.slane %v41, %v45
    %48 = vmatprep.subr.mxu0 0.0
    %49 = vmatpush1.msra.mxu0 %v40
    %50 = vmatprep.subr.mxu0 0.0
    %51 = vmatpush1.msra.mxu0 %v39
    %52 = vmatprep.subr.mxu0 0.0
    %53 = vmatpush1.msra.mxu0 %v38
    %54 = vmatprep.subr.mxu0 0.0
    %55 = vmatpush1.msra.mxu0 %v37
    %56 = vmatprep.subr.mxu0 0.0
    %57 = vmatpush1.msra.mxu0 %v36
    %58 = vmatprep.subr.mxu0 0.0
    %59 = vmatpush1.msra.mxu0 %v35
    %60 = vmatprep.subr.mxu0 0.0
    %61 = vmatpush1.msra.mxu0 %v34
    %62 = vmatprep.subr.mxu0 0.0
    %63 = vmatpush1.msra.mxu0 %v33
    %64 = vmatprep.subr.mxu0 0.0
    %65 = vmatpush1.msra.mxu0 %v32
    %66 = vmatprep.subr.mxu0 0.0
    %67 = vmatpush1.msra.mxu0 %v31
    %68 = vmatprep.subr.mxu0 0.0
    %69 = vmatpush1.msra.mxu0 %v30
    %70 = vmatprep.subr.mxu0 0.0
    %71 = vmatpush1.msra.mxu0 %v29
    %72 = vmatprep.subr.mxu0 0.0
    %73 = vmatpush1.msra.mxu0 %v28
    %74 = vmatprep.subr.mxu0 0.0
    %75 = vmatpush1.msra.mxu0 %v27
    %76 = vmatprep.subr.mxu0 0.0
    %77 = vmatpush1.msra.mxu0 %v26
    %78 = vmatprep.subr.mxu0 0.0
    %79 = vmatpush1.msra.mxu0 %v25
    %80 = vmatprep.subr.mxu0 0.0
    %81 = vmatpush2.msra.mxu0 0.0
    %82 = vmatprep.subr.mxu0 0.0
    %83 = vmatpush2.msra.mxu0 0.0
    %84 = vmatprep.subr.mxu0 0.0
    %85 = vmatpush2.msra.mxu0 0.0
    %86 = vmatprep.subr.mxu0 0.0
    %87 = vmatpush2.msra.mxu0 0.0
    %88 = vmatprep.subr.mxu0 0.0
    %89 = vmatpush2.msra.mxu0 0.0
    %90 = vmatprep.subr.mxu0 0.0
    %91 = vmatpush2.msra.mxu0 0.0
    %92 = vmatprep.subr.mxu0 0.0
    %93 = vmatpush2.msra.mxu0 0.0
    %94 = vmatprep.subr.mxu0 0.0
    %95 = vmatpush2.msra.mxu0 0.0
    %96 = vmatprep.subr.mxu0 0.0
    %97 = vmatpush2.msra.mxu0 0.0
    %98 = vmatprep.subr.mxu0 0.0
    %99 = vmatpush2.msra.mxu0 0.0
    %100 = vmatprep.subr.mxu0 0.0
    %101 = vmatpush2.msra.mxu0 0.0
    %102 = vmatprep.subr.mxu0 0.0
    %103 = vmatpush2.msra.mxu0 0.0
    %104 = vmatprep.subr.mxu0 0.0
    %105 = vmatpush2.msra.mxu0 0.0
    %106 = vmatprep.subr.mxu0 0.0
    %107 = vmatpush2.msra.mxu0 0.0
    %108 = vmatprep.subr.mxu0 0.0
    %109 = vmatpush2.msra.mxu0 0.0
    %110 = vmatprep.subr.mxu0 0.0
    %111 = vmatpush2.msra.mxu0 0.0
    %112 = vmatprep.mubr.f32.mxu0 0.0
    %113 = vmatmul.mubr.f32.gmra.mxu0 %v24
    %v114 = vpop.f32.mrf.mxu0
    %v115 = vadd.f32 %v46, %v114
    %v116 = vpop.f32.mrf.mxu0
    %117 = vdwg.mxu0
    %v118 = vmax.f32 %v115, 0.0
    %v119 = vld [vmem:[%s4] sm:$0xff]
    %v120 = vld [vmem:[%s4 + $0x8] sm:$0xff]
    %v121 = vld [vmem:[%s4 + $0x10] sm:$0xff]
    %v122 = vld [vmem:[%s4 + $0x18] sm:$0xff]
    %v123 = vld [vmem:[%s4 + $0x20] sm:$0xff]
    %v124 = vld [vmem:[%s4 + $0x28] sm:$0xff]
    %v125 = vld [vmem:[%s4 + $0x30] sm:$0xff]
    %v126 = vld [vmem:[%s4 + $0x38] sm:$0xff]
    %v127 = vld [vmem:[%s5] sm:$0x3]
    %v129 = vlaneseq
    %v130 = vshrl.u32 %v129, 7
    %v131 = vsub.s32 0, %v130
    %v132 = vrot.slane %v127, %v131
    %v133 = vlaneseq
    %v134 = vshrl.u32 %v133, 7
    %v135 = vsub.s32 1, %v134
    %v136 = vrot.slane %v127, %v135
    %vm139 = vcmask 261120
    %v141 = vsel %vm139, %v118, 0
    %143 = vmatprep.subr.mxu0 0.0
    %144 = vmatpush1.msra.mxu0 0.0
    %145 = vmatprep.subr.mxu0 0.0
    %146 = vmatpush1.msra.mxu0 0.0
    %147 = vmatprep.subr.mxu0 0.0
    %148 = vmatpush1.msra.mxu0 0.0
    %149 = vmatprep.subr.mxu0 0.0
    %150 = vmatpush1.msra.mxu0 0.0
    %151 = vmatprep.subr.mxu0 0.0
    %152 = vmatpush1.msra.mxu0 0.0
    %153 = vmatprep.subr.mxu0 0.0
    %154 = vmatpush1.msra.mxu0 0.0
    %155 = vmatprep.subr.mxu0 0.0
    %156 = vmatpush1.msra.mxu0 0.0
    %157 = vmatprep.subr.mxu0 0.0
    %158 = vmatpush1.msra.mxu0 0.0
    %159 = vmatprep.subr.mxu0 0.0
    %160 = vmatpush1.msra.mxu0 0.0
    %161 = vmatprep.subr.mxu0 0.0
    %162 = vmatpush1.msra.mxu0 0.0
    %163 = vmatprep.subr.mxu0 0.0
    %164 = vmatpush1.msra.mxu0 0.0
    %165 = vmatprep.subr.mxu0 0.0
    %166 = vmatpush1.msra.mxu0 0.0
    %167 = vmatprep.subr.mxu0 %v126
    %168 = vmatpush1.msra.mxu0 %v125
    %169 = vmatprep.subr.mxu0 %v124
    %170 = vmatpush1.msra.mxu0 %v123
    %171 = vmatprep.subr.mxu0 %v122
    %172 = vmatpush1.msra.mxu0 %v121
    %173 = vmatprep.subr.mxu0 %v120
    %174 = vmatpush1.msra.mxu0 %v119
    %175 = vmatprep.subr.mxu0 0.0
    %176 = vmatpush2.msra.mxu0 0.0
    %177 = vmatprep.subr.mxu0 0.0
    %178 = vmatpush2.msra.mxu0 0.0
    %179 = vmatprep.subr.mxu0 0.0
    %180 = vmatpush2.msra.mxu0 0.0
    %181 = vmatprep.subr.mxu0 0.0
    %182 = vmatpush2.msra.mxu0 0.0
    %183 = vmatprep.subr.mxu0 0.0
    %184 = vmatpush2.msra.mxu0 0.0
    %185 = vmatprep.subr.mxu0 0.0
    %186 = vmatpush2.msra.mxu0 0.0
    %187 = vmatprep.subr.mxu0 0.0
    %188 = vmatpush2.msra.mxu0 0.0
    %189 = vmatprep.subr.mxu0 0.0
    %190 = vmatpush2.msra.mxu0 0.0
    %191 = vmatprep.subr.mxu0 0.0
    %192 = vmatpush2.msra.mxu0 0.0
    %193 = vmatprep.subr.mxu0 0.0
    %194 = vmatpush2.msra.mxu0 0.0
    %195 = vmatprep.subr.mxu0 0.0
    %196 = vmatpush2.msra.mxu0 0.0
    %197 = vmatprep.subr.mxu0 0.0
    %198 = vmatpush2.msra.mxu0 0.0
    %199 = vmatprep.subr.mxu0 0.0
    %200 = vmatpush2.msra.mxu0 0.0
    %201 = vmatprep.subr.mxu0 0.0
    %202 = vmatpush2.msra.mxu0 0.0
    %203 = vmatprep.subr.mxu0 0.0
    %204 = vmatpush2.msra.mxu0 0.0
    %205 = vmatprep.subr.mxu0 0.0
    %206 = vmatpush2.msra.mxu0 0.0
    %207 = vmatprep.mubr.f32.mxu0 0.0
    %208 = vmatmul.mubr.f32.gmra.mxu0 %v141
    %v209 = vpop.f32.mrf.mxu0
    %v210 = vadd.f32 %v132, %v209
    %v211 = vpop.f32.mrf.mxu0
    %v212 = vadd.f32 %v136, %v211
    %213 = vdwg.mxu0
    %v214 = vxor.u32 %v210, 2147483648
    %v215 = vmul.f32 %v214, 1.442695
    %v216 = vpow.pop %v215
    %v217 = vadd.f32 %v216, 1.0
    %v218 = vrcp.pop %v217
    %v219 = vmul.f32 1.0, %v218
    %v220 = vld [vmem:[%s1] sm:$0xff]
    %v221 = vmul.f32 %v220, %v219
    %v222 = vadd.f32 %v221, %v212
    %223 = vst [vmem:[#allocation2] sm:$0xff] %v222
    // Predicated region
    $region26: #{tpu_custom_call.1} parent=1 // pred_check
      _
    $region27: #{tpu_custom_call.1} parent=1 // pred_check_branch
      %225 = sbr.rel (0) target = $region29
    $region28: #{tpu_custom_call.1} parent=1 // pred_region
      %s227 = ssub.s32 128, 128
      %228 = vsyncadd [#allocation3], %s227
      %s230 = sshll.u32 [#allocation2], 4
      %s231 = int_to_ptr.vmem [resolvable:$true] %s230
      %233 = dma.vmem_to_hbm [thread:$0]  %s231, 128, %s6, [#allocation3]
    $region29: #{tpu_custom_call.1} parent=1 // pred_fallthru
      _
    // Predicated region
    $region30: #{tpu_custom_call.1} parent=1 // pred_check
      _
    $region31: #{tpu_custom_call.1} parent=1 // pred_check_branch
      %235 = sbr.rel (0) target = $region33
    $region32: #{tpu_custom_call.1} parent=1 // pred_region
      %236 = dma.done [#allocation3], 128
    $region33: #{tpu_custom_call.1} parent=1 // pred_fallthru
      _
    %237 = vsyncpa [#allocation3], 1

</llo_original>
